<compile_context>
chip_gen: v6e
topology: v6e:2x2x1
jax: 0.10.0
libtpu: 0.0.40
codegen_flags: <defaults>
</compile_context>

<pallas_src>
import math

import jax
import jax.numpy as jnp
from jax.experimental import pallas as pl
from jax.experimental.pallas import tpu as pltpu


# --------------------------- TPU / VMEM budgeting ---------------------------

def _phys_vmem_bytes() -> int:
    try:
        return int(pltpu.get_tpu_info().vmem_capacity_bytes)
    except Exception:
        return 64 << 20          # conservative fallback (v7x per-TC VMEM)


_PHYS_VMEM = _phys_vmem_bytes()
_BIG_VMEM = _PHYS_VMEM >= (100 << 20)                # v5e / v6e: 128 MiB
_VMEM_BUDGET = (100 << 20) if _BIG_VMEM else (48 << 20)
_WEIGHT_RESIDENT_BYTES = (64 << 20) if _BIG_VMEM else (20 << 20)
_PREFER_TWO_BLOCKS = not _BIG_VMEM                   # v7x: 2 TensorCores/chip
_MARGIN = 2 << 20
_DEF_TM = 512                                        # resident-path row tile


def _vmem_limit(estimate_bytes: int) -> int:
    # Callers guarantee estimate <= _VMEM_BUDGET (otherwise K-tile / shrink),
    # so this never clamps below the real need.
    return int(min(max(estimate_bytes, 32 << 20), _VMEM_BUDGET))


def _buffered_supported() -> bool:
    if not hasattr(pl, "Buffered"):
        return False
    try:
        pl.BlockSpec((8, 128), lambda i: (0, 0), pipeline_mode=pl.Buffered(1))
        return True
    except TypeError:
        return False


_BUFFERED_OK = _buffered_supported()


def _spec(shape, index_map, buffers=None):
    if buffers is None or not _BUFFERED_OK:
        return pl.BlockSpec(shape, index_map)
    return pl.BlockSpec(shape, index_map, pipeline_mode=pl.Buffered(buffers))


def _pick_tm(rows: int, tm: int, prefer_two_blocks: bool = False) -> int:
    if rows <= tm:
        if prefer_two_blocks and rows >= 256:
            # ~rows/2, 8-aligned -> 2 "parallel" blocks so both v7x TCs work.
            return ((rows + 15) // 16) * 8
        return rows
    return tm


def _largest_divisor_leq(n: int, cap: int) -> int:
    for c in range(min(cap, n), 0, -1):
        if n % c == 0:
            return c
    return n


# ----------------------------- Pallas kernels ------------------------------

def _make_linear_kernel(compute_dtype):
    def kernel(x_ref, wT_ref, b_ref, o_ref):
        # x: (TM, f*D); wT: (f*D, D) VMEM-resident; b: (1, D) f32 resident.
        x = x_ref[...].astype(compute_dtype)
        acc = jnp.dot(x, wT_ref[...], preferred_element_type=jnp.float32)
        o_ref[...] = (acc + b_ref[...].astype(jnp.float32)).astype(o_ref.dtype)
    return kernel


def _make_linear_ktiled_f32out_kernel(compute_dtype):
    # f32 output: accumulate directly into the resident output block.
    def kernel(x_ref, wT_ref, b_ref, o_ref):
        @pl.when(pl.program_id(1) == 0)
        def _():
            o_ref[...] = jnp.broadcast_to(
                b_ref[...].astype(jnp.float32), o_ref.shape)

        x = x_ref[...].astype(compute_dtype)
        o_ref[...] += jnp.dot(x, wT_ref[...],
                              preferred_element_type=jnp.float32)
    return kernel


def _make_linear_ktiled_kernel(compute_dtype):
    # Non-f32 output: classic f32 VMEM scratch accumulator.
    def kernel(x_ref, wT_ref, b_ref, o_ref, acc_ref):
        @pl.when(pl.program_id(1) == 0)
        def _():
            acc_ref[...] = jnp.zeros_like(acc_ref)

        x = x_ref[...].astype(compute_dtype)
        acc_ref[...] += jnp.dot(x, wT_ref[...],
                                preferred_element_type=jnp.float32)

        @pl.when(pl.program_id(1) == pl.num_programs(1) - 1)
        def _():
            o_ref[...] = (acc_ref[...] + b_ref[...].astype(jnp.float32)
                          ).astype(o_ref.dtype)
    return kernel


def _make_avg_kernel(factor: int, d_model: int):
    inv_f = 1.0 / float(factor)

    def kernel(x_ref, o_ref):
        # x: (TM, f*D) lane-dense; grouped mean = unrolled sum of f static
        # (TM, D) slices on the VPU, scaled by 1/f (multiply, not divide).
        x = x_ref[...].astype(jnp.float32)
        acc = x[:, 0:d_model]
        for i in range(1, factor):
            acc = acc + x[:, i * d_model:(i + 1) * d_model]
        o_ref[...] = (acc * inv_f).astype(o_ref.dtype)

    return kernel


# ------------------------------ JAX wrappers --------------------------------

def _grouped_view(x, f):
    B, S, D = x.shape
    new_S = S // f
    rows = B * new_S
    fd = f * D
    if S % f == 0:
        x_r = x.reshape(rows, fd)           # contiguous reshape: no HBM copy
    else:
        # TODO(synk): fold the trailing-token trim into the index_map instead
        # of materializing a sliced HBM copy.
        x_r = x[:, :new_S * f, :].reshape(rows, fd)
    return x_r, B, new_S, rows, fd, D


def linear_pool_forward(x, weight_t, bias2d, downsampling_factor,
                        tm: int = _DEF_TM, k_tile=None):
    """x: (B, S, D); weight_t: (f*D, D) = W^T (f32 or bf16); bias2d: (1, D) f32.

    Returns (B, S//f, D) in x.dtype; matmul accumulates in f32.
    """
    f = int(downsampling_factor)
    x_r, B, new_S, rows, fd, D = _grouped_view(x, f)

    cdt = weight_t.dtype
    x_item = x_r.dtype.itemsize
    out_dtype = x.dtype
    out_item = jnp.dtype(out_dtype).itemsize
    w_item = jnp.dtype(cdt).itemsize
    flops = int(2 * rows * fd * D)

    w_buf = 1 if _BUFFERED_OK else 2
    w_res_bytes = w_buf * (fd * D * w_item + D * 4)

    use_ktile = (k_tile is not None) or (w_res_bytes > _WEIGHT_RESIDENT_BYTES)

    if not use_ktile:
        TM = _pick_tm(rows, tm, _PREFER_TWO_BLOCKS)
        per_row = 2 * fd * x_item + 2 * D * out_item     # dbl-buffered x + out
        avail = _VMEM_BUDGET - w_res_bytes - _MARGIN
        if avail <= per_row * min(rows, 8):
            use_ktile = True
        else:
            max_tm = max(8, (avail // per_row) // 8 * 8)
            TM = min(TM, max_tm)

    if not use_ktile:
        per_row = 2 * fd * x_item + 2 * D * out_item
        vmem_need = w_res_bytes + TM * per_row + _MARGIN
        cost = pl.CostEstimate(
            flops=flops, transcendentals=0,
            bytes_accessed=int(rows * fd * x_item + fd * D * w_item
                               + rows * D * out_item))
        out = pl.pallas_call(
            _make_linear_kernel(cdt),
            out_shape=jax.ShapeDtypeStruct((rows, D), out_dtype),
            grid=(pl.cdiv(rows, TM),),
            in_specs=[
                pl.BlockSpec((TM, fd), lambda i: (i, 0)),
                _spec((fd, D), lambda i: (0, 0), buffers=1),   # weight resident
                _spec((1, D), lambda i: (0, 0), buffers=1),    # bias resident
            ],
            out_specs=pl.BlockSpec((TM, D), lambda i: (i, 0)),
            compiler_params=pltpu.CompilerParams(
                dimension_semantics=("parallel",),
                vmem_limit_bytes=_vmem_limit(vmem_need)),
            cost_estimate=cost,
        )(x_r, weight_t, bias2d)
        return out.reshape(B, new_S, D)

    # ---- K-tiled path: weight too large to keep fully resident in VMEM ----
    TM = _pick_tm(rows, max(tm, 1024), _PREFER_TWO_BLOCKS)
    if k_tile is not None:
        TK = _largest_divisor_leq(fd, int(k_tile))
    else:
        TK = _largest_divisor_leq(fd, 1024)
    use_scratch = jnp.dtype(out_dtype) != jnp.float32

    def est(tm_, tk_):
        e = (2 * tm_ * tk_ * x_item + 2 * tk_ * D * w_item
             + w_buf * D * 4 + 2 * tm_ * D * out_item + _MARGIN)
        if use_scratch:
            e += tm_ * D * 4
        return e

    for _ in range(32):                       # shrink working set into budget
        if est(TM, TK) <= _VMEM_BUDGET:
            break
        if TM > 256:
            TM = max(256, (TM // 2) // 8 * 8)
        elif TK > 128:
            TK = _largest_divisor_leq(fd, max(128, TK // 2))
        elif TM > 8:
            TM = max(8, (TM // 2) // 8 * 8)
        else:
            break

    grid = (pl.cdiv(rows, TM), fd // TK)
    cost = pl.CostEstimate(
        flops=flops, transcendentals=0,
        bytes_accessed=int(rows * fd * x_item
                           + fd * D * w_item * pl.cdiv(rows, TM)   # re-streamed
                           + rows * D * out_item))
    in_specs = [
        pl.BlockSpec((TM, TK), lambda i, k: (i, k)),
        pl.BlockSpec((TK, D), lambda i, k: (k, 0)),
        _spec((1, D), lambda i, k: (0, 0), buffers=1),
    ]
    out_spec = pl.BlockSpec((TM, D), lambda i, k: (i, 0))
    params = pltpu.CompilerParams(
        dimension_semantics=("parallel", "arbitrary"),
        vmem_limit_bytes=_vmem_limit(est(TM, TK)))

    if use_scratch:
        out = pl.pallas_call(
            _make_linear_ktiled_kernel(cdt),
            out_shape=jax.ShapeDtypeStruct((rows, D), out_dtype),
            grid=grid, in_specs=in_specs, out_specs=out_spec,
            scratch_shapes=[pltpu.VMEM((TM, D), jnp.float32)],
            compiler_params=params, cost_estimate=cost,
        )(x_r, weight_t, bias2d)
    else:
        out = pl.pallas_call(
            _make_linear_ktiled_f32out_kernel(cdt),
            out_shape=jax.ShapeDtypeStruct((rows, D), jnp.float32),
            grid=grid, in_specs=in_specs, out_specs=out_spec,
            compiler_params=params, cost_estimate=cost,
        )(x_r, weight_t, bias2d)
    return out.reshape(B, new_S, D)


def avg_pool_forward(x, downsampling_factor, tm: int = _DEF_TM):
    """x: (B, S, D) -> (B, S//f, D): mean over each group of f tokens.

    Like AvgPool1d(kernel=f, stride=f), trailing S % f tokens are dropped.
    """
    f = int(downsampling_factor)
    x_r, B, new_S, rows, fd, D = _grouped_view(x, f)

    itemsize = x_r.dtype.itemsize
    TM = _pick_tm(rows, tm, _PREFER_TWO_BLOCKS)
    per_row = 2 * (fd + D) * itemsize                # dbl-buffered in + out
    max_tm = max(8, ((_VMEM_BUDGET - _MARGIN) // per_row) // 8 * 8)
    TM = min(TM, max_tm)
    vmem_need = TM * per_row + _MARGIN

    out = pl.pallas_call(
        _make_avg_kernel(f, D),
        out_shape=jax.ShapeDtypeStruct((rows, D), x.dtype),
        grid=(pl.cdiv(rows, TM),),
        in_specs=[pl.BlockSpec((TM, fd), lambda i: (i, 0))],
        out_specs=pl.BlockSpec((TM, D), lambda i: (i, 0)),
        compiler_params=pltpu.CompilerParams(
            dimension_semantics=("parallel",),
            vmem_limit_bytes=_vmem_limit(vmem_need)),
    )(x_r)
    return out.reshape(B, new_S, D)


class DownsamplingLayer:
    """JAX/Pallas port of the PyTorch DownsamplingLayer (forward pass)."""

    def __init__(self, d_model: int, downsampling_factor: int,
                 downsampling_type: str, key=None,
                 compute_dtype=jnp.bfloat16):
        self.d_model = d_model
        self.factor = downsampling_factor
        self.type = downsampling_type
        if downsampling_type == "avg":
            self.weight = self.bias = self.weight_t = self.bias2d = None
        elif downsampling_type == "linear":
            if key is None:
                key = jax.random.PRNGKey(0)
            kw, kb = jax.random.split(key)
            in_features = downsampling_factor * d_model
            out_features = d_model
            # xavier_uniform_ on weight (out_features, in_features)
            limit = math.sqrt(6.0 / (in_features + out_features))
            self.weight = jax.random.uniform(
                kw, (out_features, in_features), jnp.float32, -limit, limit)
            # nn.Linear default bias init: U(-1/sqrt(fan_in), 1/sqrt(fan_in))
            b_lim = 1.0 / math.sqrt(in_features)
            self.bias = jax.random.uniform(
                kb, (out_features,), jnp.float32, -b_lim, b_lim)
            # Pre-transpose ONCE; store in compute dtype (bf16 by default:
            # halves weight HBM traffic + resident VMEM, MXU runs at bf16 peak
            # while accumulation stays f32).  Bias stays f32.
            self.weight_t = jnp.asarray(self.weight.T).astype(compute_dtype)
            self.bias2d = self.bias.reshape(1, d_model).astype(jnp.float32)
        else:
            raise ValueError(f"Invalid downsampling type: {downsampling_type}")

    def __call__(self, x):
        if self.type == "avg":
            return avg_pool_forward(x, self.factor)
        return linear_pool_forward(x, self.weight_t, self.bias2d, self.factor)


# --------------------------------- main --------------------------------------

if __name__ == "__main__":
    key = jax.random.PRNGKey(0)
    kx, kp, kx2, kp2 = jax.random.split(key, 4)

    batch, seq_len, d_model, factor = 2, 8, 32, 2
    new_S = seq_len // factor
    x = jax.random.normal(kx, (batch, seq_len, d_model), dtype=jnp.float32)
    x_r = x.reshape(batch * new_S, factor * d_model)

    # ---- linear path, default bf16 operands / f32 accumulation ----
    lin_bf16 = DownsamplingLayer(d_model, factor, "linear", key=kp)
    y_bf16 = jax.block_until_ready(lin_bf16(x))
    ref_bf16 = (jnp.dot(x_r.astype(jnp.bfloat16), lin_bf16.weight_t,
                        preferred_element_type=jnp.float32)
                + lin_bf16.bias).astype(x.dtype).reshape(batch, new_S, d_model)
    ref_f32 = (x_r @ lin_bf16.weight.T + lin_bf16.bias
               ).reshape(batch, new_S, d_model)
    assert y_bf16.shape == (batch, new_S, d_model)
    assert jnp.allclose(y_bf16, ref_bf16, atol=1e-2, rtol=1e-2)
    assert jnp.allclose(y_bf16, ref_f32, atol=5e-2, rtol=5e-2)

    # ---- linear path, exact f32 numerics (matches PyTorch) ----
    lin_f32 = DownsamplingLayer(d_model, factor, "linear", key=kp,
                                compute_dtype=jnp.float32)
    y_f32 = jax.block_until_ready(lin_f32(x))
    ref = (x_r @ lin_f32.weight.T + lin_f32.bias
           ).reshape(batch, new_S, d_model)
    assert jnp.allclose(y_f32, ref, atol=1e-5, rtol=1e-5)

    # ---- avg path ----
    avg_layer = DownsamplingLayer(d_model, factor, "avg")
    y_avg = jax.block_until_ready(avg_layer(x))
    ref_avg = x.reshape(batch, new_S, factor, d_model).mean(axis=2)
    assert y_avg.shape == (batch, new_S, d_model)
    assert jnp.allclose(y_avg, ref_avg, atol=1e-5, rtol=1e-5)

    # ---- K-tiled linear path (forced; exercises accumulate-into-output) ----
    d_model2 = 256
    x2 = jax.random.normal(kx2, (batch, seq_len, d_model2), dtype=jnp.float32)
    lin2 = DownsamplingLayer(d_model2, factor, "linear", key=kp2,
                             compute_dtype=jnp.float32)
    y2 = jax.block_until_ready(
        linear_pool_forward(x2, lin2.weight_t, lin2.bias2d, factor,
                            k_tile=256))
    x2_r = x2.reshape(batch * new_S, factor * d_model2)
    ref2 = (x2_r @ lin2.weight.T + lin2.bias
            ).reshape(batch, new_S, d_model2)
    assert jnp.allclose(y2, ref2, atol=1e-4, rtol=1e-4)

    print("KERNEL_OK")
</pallas_src>

<mosaic_0001>
module attributes {stable_mosaic.version = 11 : i64} {
  func.func @kernel(%arg0: i32, %arg1: memref<8x64xf32, #tpu.memory_space<vmem>>, %arg2: memref<64x32xbf16, #tpu.memory_space<vmem>>, %arg3: memref<1x32xf32, #tpu.memory_space<vmem>>, %arg4: memref<8x32xf32, #tpu.memory_space<vmem>>) attributes {dimension_semantics = [#tpu.dimension_semantics<parallel>], iteration_bounds = array<i64: 1>, scalar_prefetch = 0 : i64, scratch_operands = 0 : i64, tpu.core_type = #tpu.core_type<tc>, window_params = [{transform_indices = @transform_0, window_bounds = array<i64: 8, 64>}, {pipeline_mode = #tpu.pipeline_mode<synchronous>, transform_indices = @transform_1, window_bounds = array<i64: 64, 32>}, {pipeline_mode = #tpu.pipeline_mode<synchronous>, transform_indices = @transform_2, window_bounds = array<i64: 1, 32>}, {transform_indices = @transform_3, window_bounds = array<i64: 8, 32>}]} {
    %c0 = arith.constant 0 : index
    %c0_0 = arith.constant 0 : index
    %0 = vector.load %arg1[%c0, %c0_0] : memref<8x64xf32, #tpu.memory_space<vmem>>, vector<8x64xf32>
    %1 = arith.truncf %0 : vector<8x64xf32> to vector<8x64xbf16>
    %c0_1 = arith.constant 0 : index
    %c0_2 = arith.constant 0 : index
    %2 = vector.load %arg2[%c0_1, %c0_2] : memref<64x32xbf16, #tpu.memory_space<vmem>>, vector<64x32xbf16>
    %cst = arith.constant dense<0.000000e+00> : vector<8x32xf32>
    %3 = tpu.matmul %1, %2, %cst {dimension_numbers = #tpu.dot_dimension_numbers<[1], [0], [0], [1], [0, 0, 1, 1], [], []>} : vector<8x64xbf16>, vector<64x32xbf16>, vector<8x32xf32> -> vector<8x32xf32>
    %c0_3 = arith.constant 0 : index
    %c0_4 = arith.constant 0 : index
    %4 = vector.load %arg3[%c0_3, %c0_4] : memref<1x32xf32, #tpu.memory_space<vmem>>, vector<1x32xf32>
    %5 = vector.broadcast %4 : vector<1x32xf32> to vector<8x32xf32>
    %6 = arith.addf %3, %5 : vector<8x32xf32>
    %c0_5 = arith.constant 0 : index
    %c0_6 = arith.constant 0 : index
    %7 = vector.load %arg4[%c0_5, %c0_6] : memref<8x32xf32, #tpu.memory_space<vmem>>, vector<8x32xf32>
    tpu.vector_store %arg4[%c0_5, %c0_6], %6 {strides = array<i32>} : memref<8x32xf32, #tpu.memory_space<vmem>>, vector<8x32xf32>,
    return
  }
  func.func @transform_0(%arg0: i32) -> (i32, i32) {
    %c0_i32 = arith.constant 0 : i32
    %c0_i32_0 = arith.constant 0 : i32
    return %arg0, %c0_i32 : i32, i32
  }
  func.func @transform_1(%arg0: i32) -> (i32, i32) {
    %c0_i32 = arith.constant 0 : i32
    %c0_i32_0 = arith.constant 0 : i32
    %c0_i32_1 = arith.constant 0 : i32
    return %c0_i32, %c0_i32_0 : i32, i32
  }
  func.func @transform_2(%arg0: i32) -> (i32, i32) {
    %c0_i32 = arith.constant 0 : i32
    %c0_i32_0 = arith.constant 0 : i32
    %c0_i32_1 = arith.constant 0 : i32
    return %c0_i32, %c0_i32_0 : i32, i32
  }
  func.func @transform_3(%arg0: i32) -> (i32, i32) {
    %c0_i32 = arith.constant 0 : i32
    %c0_i32_0 = arith.constant 0 : i32
    return %arg0, %c0_i32 : i32, i32
  }
}

</mosaic_0001>

<llo_original>
// kernel: tpu_custom_call.1
$region0: #{tpu_custom_call.1}
  #allocation0 [shape = 'u32[]', space=smem, size = 0x4, offset = 0x4, fixed_abs, tag = 'smem constant byte address 0x4 - core index']
  #allocation1 [shape = 'u32[144,128]{1,0:T(1,128)}', space=vmem, size = 0x12000, scoped, tag = 'internal scratch']
  %s0 = inlined_call_operand.vmem [shape: f32[8,64], index: 0, kind: input, shape index: {}]
  %s1 = inlined_call_operand.vmem [shape: bf16[64,32], index: 1, kind: input, shape index: {}]
  %s2 = inlined_call_operand.vmem [shape: f32[1,32], index: 2, kind: input, shape index: {}]
  %s3 = inlined_call_operand.hbm [shape: f32[8,32], index: 3, kind: output, shape index: {}]
  %s4 = sld [smem:[#allocation0]]
  $region22: #{tpu_custom_call.1} parent=0
    _
  %s6 = ssub.s32 1, %s4
  %s7 = scalar_select 0, %s6, %s4
  $region1: #{tpu_custom_call.1} parent=0
    #allocation2 [shape = 'u8[4096]{0}', space=vmem, size = 0x1000, scoped, tag = 'output window, operand 0, single buffered']
    #allocation3 [shape = 's32[1]{0}', space=sflag, size = 0x4, scoped, tag = 'scoped memory for tpu_custom_call.1']
    %8 = vsyncpa [#allocation3], 0
    // Predicated region
    $region2: #{tpu_custom_call.1} parent=1 // pred_check
      _
    $region3: #{tpu_custom_call.1} parent=1 // pred_check_branch
      %10 = sbr.rel (0) target = $region5
    $region4: #{tpu_custom_call.1} parent=1 // pred_region
      _
    $region5: #{tpu_custom_call.1} parent=1 // pred_fallthru
      _
    // Predicated region
    $region6: #{tpu_custom_call.1} parent=1 // pred_check
      _
    $region7: #{tpu_custom_call.1} parent=1 // pred_check_branch
      %12 = sbr.rel (0) target = $region9
    $region8: #{tpu_custom_call.1} parent=1 // pred_region
      _
    $region9: #{tpu_custom_call.1} parent=1 // pred_fallthru
      _
    // Predicated region
    $region10: #{tpu_custom_call.1} parent=1 // pred_check
      _
    $region11: #{tpu_custom_call.1} parent=1 // pred_check_branch
      %14 = sbr.rel (0) target = $region13
    $region12: #{tpu_custom_call.1} parent=1 // pred_region
      _
    $region13: #{tpu_custom_call.1} parent=1 // pred_fallthru
      _
    %v16 = vld [vmem:[%s0] sm:$0xff]
    %v17 = vpack.c.bf16 %v16, %v16
    %v18 = vld [vmem:[%s1] sm:$0xf]
    %v19 = vld [vmem:[%s1 + $0x4] sm:$0xf]
    %v20 = vld [vmem:[%s1 + $0x8] sm:$0xf]
    %v21 = vld [vmem:[%s1 + $0xc] sm:$0xf]
    %v22 = vld [vmem:[%s1 + $0x10] sm:$0xf]
    %v23 = vld [vmem:[%s1 + $0x14] sm:$0xf]
    %v24 = vld [vmem:[%s1 + $0x18] sm:$0xf]
    %v25 = vld [vmem:[%s1 + $0x1c] sm:$0xf]
    %v26 = vld [vmem:[%s2] sm:$0x1]
    %v28 = vlaneseq
    %v29 = vshrl.u32 %v28, 7
    %v30 = vsub.s32 0, %v29
    %v31 = vrot.slane %v26, %v30
    %v41 = vunpack.c.l.b16 %v18
    %v42 = vunpack.c.l.b16 %v19
    %v43 = vunpack.c.l.b16 %v20
    %v44 = vunpack.c.l.b16 %v21
    %v45 = vunpack.c.l.b16 %v22
    %v46 = vunpack.c.l.b16 %v23
    %v47 = vunpack.c.l.b16 %v24
    %v48 = vunpack.c.l.b16 %v25
    %v49 = vpack.c.b16 %v42, %v41
    %v50 = vpack.c.b16 %v44, %v43
    %v51 = vpack.c.b16 %v46, %v45
    %v52 = vpack.c.b16 %v48, %v47
    %vm57 = vcmask 523264
    %v59 = vsel %vm57, %v17, 0
    %61 = vmatprep.subr.bf16.mxu0 0
    %62 = vmatpush1.bf16.msra.mxu0 0
    %63 = vmatprep.subr.bf16.mxu0 0
    %64 = vmatpush1.bf16.msra.mxu0 0
    %65 = vmatprep.subr.bf16.mxu0 0
    %66 = vmatpush1.bf16.msra.mxu0 0
    %67 = vmatprep.subr.bf16.mxu0 0
    %68 = vmatpush1.bf16.msra.mxu0 0
    %69 = vmatprep.subr.bf16.mxu0 0
    %70 = vmatpush1.bf16.msra.mxu0 %v52
    %71 = vmatprep.subr.bf16.mxu0 0
    %72 = vmatpush1.bf16.msra.mxu0 %v51
    %73 = vmatprep.subr.bf16.mxu0 0
    %74 = vmatpush1.bf16.msra.mxu0 %v50
    %75 = vmatprep.subr.bf16.mxu0 0
    %76 = vmatpush1.bf16.msra.mxu0 %v49
    %77 = vmatprep.subr.bf16.mxu0 0
    %78 = vmatpush2.bf16.msra.mxu0 0
    %79 = vmatprep.subr.bf16.mxu0 0
    %80 = vmatpush2.bf16.msra.mxu0 0
    %81 = vmatprep.subr.bf16.mxu0 0
    %82 = vmatpush2.bf16.msra.mxu0 0
    %83 = vmatprep.subr.bf16.mxu0 0
    %84 = vmatpush2.bf16.msra.mxu0 0
    %85 = vmatprep.subr.bf16.mxu0 0
    %86 = vmatpush2.bf16.msra.mxu0 0
    %87 = vmatprep.subr.bf16.mxu0 0
    %88 = vmatpush2.bf16.msra.mxu0 0
    %89 = vmatprep.subr.bf16.mxu0 0
    %90 = vmatpush2.bf16.msra.mxu0 0
    %91 = vmatprep.subr.bf16.mxu0 0
    %92 = vmatpush2.bf16.msra.mxu0 0
    %93 = vmatprep.mubr.bf16.mxu0 0
    %94 = vmatmul.mubr.bf16.gmra.mxu0 %v59
    %v95 = vpop.f32.mrf.mxu0
    %v96 = vadd.f32 %v31, %v95
    %v97 = vpop.f32.mrf.mxu0
    %v98 = vpop.f32.mrf.mxu0
    %v99 = vpop.f32.mrf.mxu0
    %100 = vdwg.mxu0
    %vm101 = vcmask 261120
    %102 = vst.msk [vmem:[#allocation2] sm:$0xff] %vm101, %v96
    // Predicated region
    $region14: #{tpu_custom_call.1} parent=1 // pred_check
      _
    $region15: #{tpu_custom_call.1} parent=1 // pred_check_branch
      %104 = sbr.rel (0) target = $region17
    $region16: #{tpu_custom_call.1} parent=1 // pred_region
      %s106 = ssub.s32 128, 128
      %107 = vsyncadd [#allocation3], %s106
      %s109 = sshll.u32 [#allocation2], 4
      %s110 = int_to_ptr.vmem [resolvable:$true] %s109
      %112 = dma.vmem_to_hbm [thread:$0]  %s110, 128, %s3, [#allocation3]
    $region17: #{tpu_custom_call.1} parent=1 // pred_fallthru
      _
    // Predicated region
    $region18: #{tpu_custom_call.1} parent=1 // pred_check
      _
    $region19: #{tpu_custom_call.1} parent=1 // pred_check_branch
      %114 = sbr.rel (0) target = $region21
    $region20: #{tpu_custom_call.1} parent=1 // pred_region
      %115 = dma.done [#allocation3], 128
    $region21: #{tpu_custom_call.1} parent=1 // pred_fallthru
      _
    %116 = vsyncpa [#allocation3], 1

</llo_original>
